<compile_context>
chip_gen: v7x
topology: tpu7x:2x2x1
jax: 0.10.0
libtpu: 0.0.40
codegen_flags: <defaults>
</compile_context>

<pallas_src>
import math

import jax
import jax.numpy as jnp
from jax.experimental import pallas as pl
from jax.experimental.pallas import tpu as pltpu

_C = math.sqrt(2.0 / math.pi)
_A = _C * 0.044715

_TARGET_BLOCK_BYTES = 2 << 20      # ~2 MiB / block; 2x(in+out) buffers ~= 8 MiB VMEM
_MIN_MULTISTEP_BYTES = 256 << 10   # below this a single grid step is cheapest


def _lambda_body_ref(x):
    """Plain-JAX reference of the wrapped func (tanh-approx GELU)."""
    return 0.5 * x * (1.0 + jnp.tanh(x * (_C + _A * (x * x))))


def _lambda_kernel(x_ref, o_ref):
    # Elementwise compute on the whole VMEM tile (VPU; tanh on the EUP slot).
    x = x_ref[...]
    dt = jnp.dtype(x_ref.dtype)
    if dt != jnp.dtype(jnp.float32) and dt != jnp.dtype(jnp.bfloat16):
        # f32 / bf16 compute natively; anything else upcasts to f32.
        x = x.astype(jnp.float32)
    inner = x * (_C + _A * (x * x))            # factored: fewer VALU ops/elem
    y = 0.5 * x * (1.0 + jnp.tanh(inner))
    o_ref[...] = y.astype(o_ref.dtype)


def _sublane_for(dtype):
    # Native sublane multiple per dtype width: f32 -> 8, bf16 -> 16, int8/fp8 -> 32.
    return {4: 8, 2: 16, 1: 32}.get(jnp.dtype(dtype).itemsize, 8)


def lambda_layer(x, *, block_rows=None):
    """Apply LambdaLayer's func to x (any shape) via a Pallas TPU kernel."""
    orig_shape = x.shape
    orig_dtype = x.dtype
    n = x.size
    if n == 0:
        return x
    itemsize = jnp.dtype(orig_dtype).itemsize
    sublane = _sublane_for(orig_dtype)

    # ---- Pick a lane-dense (rows, lanes) slab that needs NO pad copy ----
    last = orig_shape[-1] if len(orig_shape) else 1
    lanes = None
    if last % 128 == 0 and last <= 4096 and (n // last) % sublane == 0:
        lanes = last                       # collapse leading dims; free reshape
    elif n % (512 * sublane) == 0:
        lanes = 512
    elif n % (128 * sublane) == 0:
        lanes = 128

    needs_pad = lanes is None
    if needs_pad:
        # TODO(synk): truly ragged sizes fall back to a pad + slice path (one
        # extra HBM copy each way); aligned sizes never hit this branch.
        lanes = 128
        rows = pl.cdiv(pl.cdiv(n, lanes), sublane) * sublane
    else:
        rows = n // lanes

    # ---- Block sizing: <= ~2 MiB/block; >= 4 grid steps on medium+ inputs ----
    max_block_rows = max(
        sublane, (_TARGET_BLOCK_BYTES // (lanes * itemsize)) // sublane * sublane
    )
    total_bytes = rows * lanes * itemsize
    if block_rows is None:
        if total_bytes <= _MIN_MULTISTEP_BYTES:
            # Tiny input: one step — multi-step pipelining is pure overhead.
            block_rows = rows
        else:
            # >= 4 steps: DMA/compute overlap + megacore sharding on v7x.
            quarter = pl.cdiv(pl.cdiv(rows, 4), sublane) * sublane
            block_rows = min(max_block_rows, quarter)
    block_rows = max(sublane, (block_rows // sublane) * sublane)
    block_rows = min(block_rows, rows)

    grid = (pl.cdiv(rows, block_rows),)    # ragged last block: Pallas masks writeback

    x_flat = jnp.ravel(x)
    if needs_pad:
        x_flat = jnp.pad(x_flat, (0, rows * lanes - n))
    x2d = x_flat.reshape(rows, lanes)

    cost = pl.CostEstimate(
        flops=8 * n,                       # ~8 mul/add per element (factored poly)
        transcendentals=n,                 # one tanh per element
        bytes_accessed=2 * n * itemsize,
    )

    out2d = pl.pallas_call(
        _lambda_kernel,
        out_shape=jax.ShapeDtypeStruct((rows, lanes), orig_dtype),
        grid_spec=pltpu.PrefetchScalarGridSpec(
            num_scalar_prefetch=0,
            grid=grid,
            in_specs=[pl.BlockSpec((block_rows, lanes), lambda i: (i, 0))],
            out_specs=pl.BlockSpec((block_rows, lanes), lambda i: (i, 0)),
        ),
        compiler_params=pltpu.CompilerParams(
            dimension_semantics=("parallel",),   # shards steps across v7x's 2 TCs
            vmem_limit_bytes=32 << 20,           # 2x(in+out) blocks stay well under
        ),
        cost_estimate=cost,
    )(x2d)

    if needs_pad:
        return out2d.reshape(-1)[:n].reshape(orig_shape)
    return out2d.reshape(orig_shape)


if __name__ == "__main__":
    key = jax.random.PRNGKey(0)
    # Input consistent with a small NCHW conv-style tensor.
    x = jax.random.normal(key, (2, 4, 16, 16), dtype=jnp.float32)

    y = lambda_layer(x)
    y = jax.block_until_ready(y)

    # Reference: plain-JAX application of the same lambda.
    y_ref = _lambda_body_ref(x)
    assert y.shape == x.shape and y.dtype == x.dtype
    assert jnp.allclose(y, y_ref, atol=1e-5, rtol=1e-5)

    print("KERNEL_OK")
</pallas_src>

<mosaic_0001>
module attributes {stable_mosaic.version = 11 : i64} {
  func.func @_lambda_kernel(%arg0: i32, %arg1: memref<16x128xf32, #tpu.memory_space<vmem>>, %arg2: memref<16x128xf32, #tpu.memory_space<vmem>>) attributes {dimension_semantics = [#tpu.dimension_semantics<parallel>], iteration_bounds = array<i64: 1>, scalar_prefetch = 0 : i64, scratch_operands = 0 : i64, tpu.core_type = #tpu.core_type<tc>, window_params = [{transform_indices = @transform_0, window_bounds = array<i64: 16, 128>}, {transform_indices = @transform_1, window_bounds = array<i64: 16, 128>}]} {
    %c0 = arith.constant 0 : index
    %c0_0 = arith.constant 0 : index
    %0 = vector.load %arg1[%c0, %c0_0] : memref<16x128xf32, #tpu.memory_space<vmem>>, vector<16x128xf32>
    %1 = arith.mulf %0, %0 : vector<16x128xf32>
    %cst = arith.constant 0.0356774069 : f32
    %2 = vector.broadcast %cst : f32 to vector<16x128xf32>
    %3 = arith.mulf %2, %1 : vector<16x128xf32>
    %cst_1 = arith.constant 0.797884583 : f32
    %4 = vector.broadcast %cst_1 : f32 to vector<16x128xf32>
    %5 = arith.addf %4, %3 : vector<16x128xf32>
    %6 = arith.mulf %0, %5 : vector<16x128xf32>
    %cst_2 = arith.constant 5.000000e-01 : f32
    %7 = vector.broadcast %cst_2 : f32 to vector<16x128xf32>
    %8 = arith.mulf %7, %0 : vector<16x128xf32>
    %9 = math.tanh %6 : vector<16x128xf32>
    %cst_3 = arith.constant 1.000000e+00 : f32
    %10 = vector.broadcast %cst_3 : f32 to vector<16x128xf32>
    %11 = arith.addf %10, %9 : vector<16x128xf32>
    %12 = arith.mulf %8, %11 : vector<16x128xf32>
    %c0_4 = arith.constant 0 : index
    %c0_5 = arith.constant 0 : index
    %13 = vector.load %arg2[%c0_4, %c0_5] : memref<16x128xf32, #tpu.memory_space<vmem>>, vector<16x128xf32>
    tpu.vector_store %arg2[%c0_4, %c0_5], %12 {strides = array<i32>} : memref<16x128xf32, #tpu.memory_space<vmem>>, vector<16x128xf32>,
    return
  }
  func.func @transform_0(%arg0: i32) -> (i32, i32) {
    %c0_i32 = arith.constant 0 : i32
    %c0_i32_0 = arith.constant 0 : i32
    return %arg0, %c0_i32 : i32, i32
  }
  func.func @transform_1(%arg0: i32) -> (i32, i32) {
    %c0_i32 = arith.constant 0 : i32
    %c0_i32_0 = arith.constant 0 : i32
    return %arg0, %c0_i32 : i32, i32
  }
}

</mosaic_0001>

<llo_original>
// kernel: tpu_custom_call.1
$region0: #{tpu_custom_call.1}
  #allocation0 [shape = 'u32[]', space=smem, size = 0x4, offset = 0x4, fixed_abs, tag = 'smem constant byte address 0x4 - core index']
  #allocation1 [shape = 'u32[144,128]{1,0:T(1,128)}', space=vmem, size = 0x12000, scoped, tag = 'internal scratch']
  %s0 = inlined_call_operand.hbm [shape: f32[16,128], index: 0, kind: input, shape index: {}]
  %s1 = inlined_call_operand.hbm [shape: f32[16,128], index: 1, kind: output, shape index: {}]
  %s2 = sld [smem:[#allocation0]]
  $region18: #{tpu_custom_call.1} parent=0
    _
  %s4 = ssub.s32 1, %s2
  %s5 = scalar_select 0, %s4, %s2
  $region1: #{tpu_custom_call.1} parent=0
    #allocation2 [shape = 'u8[8192]{0}', space=vmem, size = 0x2000, scoped, tag = 'input window, operand 0, single buffered']
    #allocation3 [shape = 's32[1]{0}', space=sflag, size = 0x4, scoped, tag = 'scoped memory for tpu_custom_call.1']
    #allocation4 [shape = 's32[1]{0}', space=sflag, size = 0x4, scoped, tag = 'scoped memory for tpu_custom_call.1']
    #allocation5 [shape = 'u8[8192]{0}', space=vmem, size = 0x2000, scoped, tag = 'output window, operand 0, single buffered']
    %6 = vsyncpa [#allocation3], 0
    %7 = vsyncpa [#allocation4], 0
    // Predicated region
    $region2: #{tpu_custom_call.1} parent=1 // pred_check
      _
    $region3: #{tpu_custom_call.1} parent=1 // pred_check_branch
      %9 = sbr.rel (0) target = $region5
    $region4: #{tpu_custom_call.1} parent=1 // pred_region
      %s11 = ssub.s32 256, 256
      %12 = vsyncadd [#allocation3], %s11
      %s13 = sshll.u32 [#allocation2], 4
      %s14 = int_to_ptr.vmem [resolvable:$true] %s13
      %19 = dma.hbm_to_vmem [thread:$0]  %s0, 256, %s14, [#allocation3], 128, 128, 8
    $region5: #{tpu_custom_call.1} parent=1 // pred_fallthru
      _
    // Predicated region
    $region6: #{tpu_custom_call.1} parent=1 // pred_check
      _
    $region7: #{tpu_custom_call.1} parent=1 // pred_check_branch
      %21 = sbr.rel (0) target = $region9
    $region8: #{tpu_custom_call.1} parent=1 // pred_region
      %22 = dma.done [#allocation3], 256
    $region9: #{tpu_custom_call.1} parent=1 // pred_fallthru
      _
    %v23 = vld [vmem:[#allocation2] sm:$0xff]
    %v24 = vld [vmem:[#allocation2 + $0x8] sm:$0xff]
    %v25 = vmul.f32 %v23, %v23
    %v26 = vmul.f32 %v24, %v24
    %v27 = vmul.f32 %v25, 0.035677407
    %v28 = vmul.f32 %v26, 0.035677407
    %v29 = vadd.f32 %v27, 0.7978846
    %v30 = vadd.f32 %v28, 0.7978846
    %v31 = vmul.f32 %v23, %v29
    %v32 = vmul.f32 %v24, %v30
    %v33 = vmul.f32 %v23, 0.5
    %v34 = vmul.f32 %v24, 0.5
    %v35 = vtanh.pop %v31
    %v36 = vtanh.pop %v32
    %v37 = vadd.f32 %v35, 1.0
    %v38 = vadd.f32 %v36, 1.0
    %v39 = vmul.f32 %v33, %v37
    %v40 = vmul.f32 %v34, %v38
    %41 = vst [vmem:[#allocation5] sm:$0xff] %v39
    %42 = vst [vmem:[#allocation5 + $0x8] sm:$0xff] %v40
    // Predicated region
    $region10: #{tpu_custom_call.1} parent=1 // pred_check
      _
    $region11: #{tpu_custom_call.1} parent=1 // pred_check_branch
      %44 = sbr.rel (0) target = $region13
    $region12: #{tpu_custom_call.1} parent=1 // pred_region
      %s46 = ssub.s32 256, 256
      %47 = vsyncadd [#allocation4], %s46
      %s48 = sshll.u32 [#allocation5], 4
      %s49 = int_to_ptr.vmem [resolvable:$true] %s48
      %54 = dma.vmem_to_hbm [thread:$0]  %s49, 256, %s1, [#allocation4], 128, 128, 8
    $region13: #{tpu_custom_call.1} parent=1 // pred_fallthru
      _
    // Predicated region
    $region14: #{tpu_custom_call.1} parent=1 // pred_check
      _
    $region15: #{tpu_custom_call.1} parent=1 // pred_check_branch
      %56 = sbr.rel (0) target = $region17
    $region16: #{tpu_custom_call.1} parent=1 // pred_region
      %57 = dma.done [#allocation4], 256
    $region17: #{tpu_custom_call.1} parent=1 // pred_fallthru
      _
    %58 = vsyncpa [#allocation3], 1
    %59 = vsyncpa [#allocation4], 1

</llo_original>
